<compile_context>
chip_gen: v7x
topology: tpu7x:2x2x1
jax: 0.10.0
libtpu: 0.0.40
codegen_flags: <defaults>
</compile_context>

<pallas_src>
import jax
import jax.numpy as jnp
from jax.experimental import pallas as pl
from jax.experimental.pallas import tpu as pltpu

_LANE = 128
_SUBLANE = 8
_SMALL_C_MAX = 16     # use the batch-on-lanes packed path for C <= this


def _round_up(x, m):
    return (x + m - 1) // m * m


def _device_budgets():
    """Per-generation (block_budget_bytes, vmem_limit_bytes)."""
    try:
        kind = jax.devices()[0].device_kind.lower()
    except Exception:
        kind = ""
    if "v7" in kind:
        # v7x: only 64 MiB VMEM per TensorCore -> small blocks, total < ~48 MiB.
        return 6 * 1024 * 1024, 48 * 1024 * 1024
    if "v5" in kind or "v6" in kind:
        # v5e/v6e: 128 MiB physical VMEM -> bigger blocks amortize per-step cost.
        return 10 * 1024 * 1024, 64 * 1024 * 1024
    # Unknown / older chips: stay conservative, keep the default scoped limit.
    return 4 * 1024 * 1024, None


# --------------------------------------------------------------------------
# Small-C path: classes on the leading dim, batch packed (sublane, 128-lane).
# --------------------------------------------------------------------------
def _iw_ce_small_c_kernel(logits_ref, target_ref, weights_ref, out_ref):
    # logits_ref : [C, TBS, 128] (native dtype)
    # target_ref : [TBS, 128] int32        weights_ref: [TBS, 128] float32
    # out_ref    : [1, 8, 128] float32 per-tile lane-dense partial
    num_classes = logits_ref.shape[0]
    tbs = target_ref.shape[0]
    t = target_ref[...]
    w = weights_ref[...]

    # max / target-select in the input dtype (exact); elementwise only -> VPU.
    x0 = logits_ref[0]
    m = x0
    sel = jnp.where(t == 0, x0, jnp.zeros_like(x0))
    for c in range(1, num_classes):
        xc = logits_ref[c]
        m = jnp.maximum(m, xc)
        sel = sel + jnp.where(t == c, xc, jnp.zeros_like(xc))
    mf = m.astype(jnp.float32)

    if num_classes == 1:
        lse = mf
    elif num_classes == 2:
        # lse = max + log(1 + exp(min - max)): halves the exp count on the EUP.
        lo = jnp.minimum(logits_ref[0], logits_ref[1]).astype(jnp.float32)
        lse = mf + jnp.log(1.0 + jnp.exp(lo - mf))
    else:
        s = jnp.zeros((tbs, _LANE), jnp.float32)
        for c in range(num_classes):
            s = s + jnp.exp(logits_ref[c].astype(jnp.float32) - mf)
        lse = mf + jnp.log(s)

    loss = (lse - sel.astype(jnp.float32)) * w          # [TBS, 128] f32

    # Reduce along sublane groups only (pure vreg adds, no cross-lane XLU,
    # bounded-depth f32 accumulation); store a lane-dense (8, 128) partial.
    acc = loss[0:_SUBLANE, :]
    for g in range(1, tbs // _SUBLANE):
        acc = acc + loss[g * _SUBLANE:(g + 1) * _SUBLANE, :]
    out_ref[0] = acc


def _small_c_total(logits, target, weights, block_budget, vmem_limit):
    b, c = logits.shape
    isz = logits.dtype.itemsize
    sub_mult = _SUBLANE * max(1, 4 // isz)        # 8 for f32, 16 for bf16, ...

    # VMEM bytes per 128-batch-item row: 2x double-buffered native logits +
    # f32 exp/loss temps + target/weights rows.
    cost_per_row = _LANE * (c * (2 * isz + 4) + 32)
    tbs = max(sub_mult, (block_budget // cost_per_row) // sub_mult * sub_mult)
    r = pl.cdiv(b, _LANE)                         # 128-wide batch row groups
    tbs = min(tbs, _round_up(r, sub_mult))
    if r > sub_mult:
        # Keep >= 2 (target ~4) grid steps so both v7x TensorCores get work.
        tbs = min(tbs, max(sub_mult, _round_up(pl.cdiv(r, 4), sub_mult)))
    num_tiles = pl.cdiv(r, tbs)
    r_pad = num_tiles * tbs
    pad = r_pad * _LANE - b

    # Single fused relayout pass: transpose to class-major + zero-pad, then a
    # free (contiguous) reshape to [C, r_pad, 128].  Padded columns carry
    # logit 0 / target 0 / weight 0 -> exactly zero contribution.
    # TODO(synk): have the producer emit logits already as [C, B] (class-major)
    # so even this single extra HBM pass disappears.
    logits_t = jnp.pad(logits.T, ((0, 0), (0, pad))).reshape(c, r_pad, _LANE)
    target_r = jnp.pad(target, (0, pad)).reshape(r_pad, _LANE)
    weights_r = jnp.pad(weights, (0, pad)).reshape(r_pad, _LANE)

    partials = pl.pallas_call(
        _iw_ce_small_c_kernel,
        out_shape=jax.ShapeDtypeStruct((num_tiles, _SUBLANE, _LANE), jnp.float32),
        grid=(num_tiles,),
        in_specs=[
            pl.BlockSpec((c, tbs, _LANE), lambda i: (0, i, 0)),
            pl.BlockSpec((tbs, _LANE), lambda i: (i, 0)),
            pl.BlockSpec((tbs, _LANE), lambda i: (i, 0)),
        ],
        out_specs=pl.BlockSpec((1, _SUBLANE, _LANE), lambda i: (i, 0, 0)),
        compiler_params=pltpu.CompilerParams(
            dimension_semantics=("parallel",),
            vmem_limit_bytes=vmem_limit),
    )(logits_t, target_r, weights_r)
    return jnp.sum(partials)


# --------------------------------------------------------------------------
# Wide-C path: batch on sublanes, classes on lanes.  No wrapper padding:
# the last tile is ragged and masked in-kernel.
# --------------------------------------------------------------------------
def _make_wide_c_kernel(batch):
    def kernel(logits_ref, target_ref, weights_ref, out_ref):
        # logits_ref : [TB, C] (native dtype)
        # target_ref : [TB, 1] int32        weights_ref: [TB, 1] float32
        # out_ref    : [1, 8, 1] float32 per-tile partial
        tb = logits_ref.shape[0]
        row0 = pl.program_id(0) * tb
        rows = row0 + jax.lax.broadcasted_iota(jnp.int32, (tb, 1), 0)
        valid = rows < batch                              # ragged last tile

        x_raw = logits_ref[...]
        # Mask garbage logits (could be Inf/NaN) AND weights of invalid rows.
        x = jnp.where(valid, x_raw, jnp.zeros_like(x_raw))
        w = jnp.where(valid, weights_ref[...], 0.0)
        t = target_ref[...]

        xf = x.astype(jnp.float32)
        mf = jnp.max(xf, axis=1, keepdims=True)
        lse = mf + jnp.log(jnp.sum(jnp.exp(xf - mf), axis=1, keepdims=True))
        class_ids = jax.lax.broadcasted_iota(jnp.int32, xf.shape, 1)
        sel = jnp.sum(jnp.where(class_ids == t, xf, 0.0), axis=1, keepdims=True)
        loss = (lse - sel) * w                            # [TB, 1] f32

        acc = loss[0:_SUBLANE, :]
        for g in range(1, tb // _SUBLANE):
            acc = acc + loss[g * _SUBLANE:(g + 1) * _SUBLANE, :]
        out_ref[0] = acc
    return kernel


def _wide_c_total(logits, target, weights, block_budget, vmem_limit):
    b, c = logits.shape
    isz = logits.dtype.itemsize
    sub_mult = _SUBLANE * max(1, 4 // isz)

    # VMEM bytes per batch row: 2x double-buffered native logits row + f32
    # temps + lane-padded target/weights/output rows.
    cost_per_row = c * (2 * isz + 8) + 5 * _LANE * 4
    tb = max(sub_mult, (block_budget // cost_per_row) // sub_mult * sub_mult)
    tb = min(tb, _round_up(b, sub_mult))
    if b > sub_mult:
        # Keep >= 2 (target ~4) grid steps for v7x's two TensorCores.
        tb = min(tb, max(sub_mult, _round_up(pl.cdiv(b, 4), sub_mult)))
    num_tiles = pl.cdiv(b, tb)

    partials = pl.pallas_call(
        _make_wide_c_kernel(b),
        out_shape=jax.ShapeDtypeStruct((num_tiles, _SUBLANE, 1), jnp.float32),
        grid=(num_tiles,),
        in_specs=[
            pl.BlockSpec((tb, c), lambda i: (i, 0)),
            pl.BlockSpec((tb, 1), lambda i: (i, 0)),
            pl.BlockSpec((tb, 1), lambda i: (i, 0)),
        ],
        out_specs=pl.BlockSpec((1, _SUBLANE, 1), lambda i: (i, 0, 0)),
        compiler_params=pltpu.CompilerParams(
            dimension_semantics=("parallel",),
            vmem_limit_bytes=vmem_limit),
    )(logits, target.reshape(b, 1), weights.reshape(b, 1))
    return jnp.sum(partials)


# --------------------------------------------------------------------------
# Public entry point.
# --------------------------------------------------------------------------
def instance_weighted_cross_entropy_loss(logits, target, weights,
                                         block_bytes=None,
                                         vmem_limit_bytes=None):
    """mean_i((logsumexp(logits_i) - logits_i[target_i]) * weights_i)."""
    b, c = logits.shape
    target = target.reshape(b).astype(jnp.int32)
    weights = weights.reshape(b).astype(jnp.float32)
    auto_block, auto_vmem = _device_budgets()
    if block_bytes is None:
        block_bytes = auto_block
    if vmem_limit_bytes is None:
        vmem_limit_bytes = auto_vmem
    if c <= _SMALL_C_MAX:
        total = _small_c_total(logits, target, weights, block_bytes,
                               vmem_limit_bytes)
    else:
        total = _wide_c_total(logits, target, weights, block_bytes,
                              vmem_limit_bytes)
    return total / jnp.float32(b)


def _reference(logits, target, weights):
    t = target.reshape(-1)
    lg = logits.astype(jnp.float32)
    lse = jax.scipy.special.logsumexp(lg, axis=1)
    sel = jnp.take_along_axis(lg, t[:, None], axis=1)[:, 0]
    return jnp.mean((lse - sel) * weights.reshape(-1).astype(jnp.float32))


if __name__ == "__main__":
    key = jax.random.PRNGKey(0)
    k1, k2, k3, k4, k5, k6, k7, k8, k9 = jax.random.split(key, 9)

    # Case 1: the module's hot shape — gender classification, batch=64, C=2.
    B, C = 64, 2
    logits = jax.random.normal(k1, (B, C), dtype=jnp.float32)
    target = jax.random.randint(k2, (B, 1), 0, C, dtype=jnp.int32)
    weights = jax.random.uniform(k3, (B,), dtype=jnp.float32)
    out = jax.block_until_ready(
        instance_weighted_cross_entropy_loss(logits, target, weights))
    ref = _reference(logits, target, weights)
    assert jnp.allclose(out, ref, atol=1e-5, rtol=1e-5), (out, ref)

    # Case 2: bf16 logits, larger batch -> multi-tile packed small-C path.
    B2, C2 = 2500, 2
    logits2 = jax.random.normal(k4, (B2, C2), dtype=jnp.float32).astype(jnp.bfloat16)
    target2 = jax.random.randint(k5, (B2, 1), 0, C2, dtype=jnp.int32)
    weights2 = jax.random.uniform(k6, (B2,), dtype=jnp.float32)
    out2 = jax.block_until_ready(
        instance_weighted_cross_entropy_loss(logits2, target2, weights2))
    ref2 = _reference(logits2, target2, weights2)
    assert jnp.allclose(out2, ref2, atol=1e-5, rtol=1e-4), (out2, ref2)

    # Case 3: wide-C path (C=130), ragged last tile exercises in-kernel masking.
    B3, C3 = 42, 130
    logits3 = jax.random.normal(k7, (B3, C3), dtype=jnp.float32)
    target3 = jax.random.randint(k8, (B3, 1), 0, C3, dtype=jnp.int32)
    weights3 = jax.random.uniform(k9, (B3,), dtype=jnp.float32)
    out3 = jax.block_until_ready(
        instance_weighted_cross_entropy_loss(logits3, target3, weights3))
    ref3 = _reference(logits3, target3, weights3)
    assert jnp.allclose(out3, ref3, atol=1e-5, rtol=1e-5), (out3, ref3)

    print("KERNEL_OK")
</pallas_src>

<mosaic_0001>
module attributes {stable_mosaic.version = 11 : i64} {
  func.func @_iw_ce_small_c_kernel(%arg0: i32, %arg1: memref<2x8x128xf32, #tpu.memory_space<vmem>>, %arg2: memref<8x128xi32, #tpu.memory_space<vmem>>, %arg3: memref<8x128xf32, #tpu.memory_space<vmem>>, %arg4: memref<1x8x128xf32, #tpu.memory_space<vmem>>) attributes {dimension_semantics = [#tpu.dimension_semantics<parallel>], iteration_bounds = array<i64: 1>, scalar_prefetch = 0 : i64, scratch_operands = 0 : i64, tpu.core_type = #tpu.core_type<tc>, window_params = [{transform_indices = @transform_0, window_bounds = array<i64: 2, 8, 128>}, {transform_indices = @transform_1, window_bounds = array<i64: 8, 128>}, {transform_indices = @transform_2, window_bounds = array<i64: 8, 128>}, {transform_indices = @transform_3, window_bounds = array<i64: 1, 8, 128>}]} {
    %c0 = arith.constant 0 : index
    %c0_0 = arith.constant 0 : index
    %0 = vector.load %arg2[%c0, %c0_0] : memref<8x128xi32, #tpu.memory_space<vmem>>, vector<8x128xi32>
    %c0_1 = arith.constant 0 : index
    %c0_2 = arith.constant 0 : index
    %1 = vector.load %arg3[%c0_1, %c0_2] : memref<8x128xf32, #tpu.memory_space<vmem>>, vector<8x128xf32>
    %c0_3 = arith.constant 0 : index
    %c0_4 = arith.constant 0 : index
    %c0_5 = arith.constant 0 : index
    %2 = vector.load %arg1[%c0_3, %c0_4, %c0_5] : memref<2x8x128xf32, #tpu.memory_space<vmem>>, vector<1x8x128xf32>
    %3 = vector.shape_cast %2 : vector<1x8x128xf32> to vector<8x128xf32>
    %c0_i32 = arith.constant 0 : i32
    %4 = vector.broadcast %c0_i32 : i32 to vector<8x128xi32>
    %5 = arith.cmpi eq, %0, %4 : vector<8x128xi32>
    %cst = arith.constant 0.000000e+00 : f32
    %6 = vector.broadcast %cst : f32 to vector<8x128xf32>
    %7 = arith.select %5, %3, %6 : vector<8x128xi1>, vector<8x128xf32>
    %c1 = arith.constant 1 : index
    %c0_6 = arith.constant 0 : index
    %c0_7 = arith.constant 0 : index
    %8 = vector.load %arg1[%c1, %c0_6, %c0_7] : memref<2x8x128xf32, #tpu.memory_space<vmem>>, vector<1x8x128xf32>
    %9 = vector.shape_cast %8 : vector<1x8x128xf32> to vector<8x128xf32>
    %10 = arith.maximumf %3, %9 : vector<8x128xf32>
    %c1_i32 = arith.constant 1 : i32
    %11 = vector.broadcast %c1_i32 : i32 to vector<8x128xi32>
    %12 = arith.cmpi eq, %0, %11 : vector<8x128xi32>
    %cst_8 = arith.constant 0.000000e+00 : f32
    %13 = vector.broadcast %cst_8 : f32 to vector<8x128xf32>
    %14 = arith.select %12, %9, %13 : vector<8x128xi1>, vector<8x128xf32>
    %15 = arith.addf %7, %14 : vector<8x128xf32>
    %c0_9 = arith.constant 0 : index
    %c0_10 = arith.constant 0 : index
    %c0_11 = arith.constant 0 : index
    %16 = vector.load %arg1[%c0_9, %c0_10, %c0_11] : memref<2x8x128xf32, #tpu.memory_space<vmem>>, vector<1x8x128xf32>
    %17 = vector.shape_cast %16 : vector<1x8x128xf32> to vector<8x128xf32>
    %c1_12 = arith.constant 1 : index
    %c0_13 = arith.constant 0 : index
    %c0_14 = arith.constant 0 : index
    %18 = vector.load %arg1[%c1_12, %c0_13, %c0_14] : memref<2x8x128xf32, #tpu.memory_space<vmem>>, vector<1x8x128xf32>
    %19 = vector.shape_cast %18 : vector<1x8x128xf32> to vector<8x128xf32>
    %20 = arith.minimumf %17, %19 : vector<8x128xf32>
    %21 = arith.subf %20, %10 : vector<8x128xf32>
    %22 = math.exp %21 : vector<8x128xf32>
    %cst_15 = arith.constant 1.000000e+00 : f32
    %23 = vector.broadcast %cst_15 : f32 to vector<8x128xf32>
    %24 = arith.addf %23, %22 : vector<8x128xf32>
    %25 = math.log %24 : vector<8x128xf32>
    %26 = arith.addf %10, %25 : vector<8x128xf32>
    %27 = arith.subf %26, %15 : vector<8x128xf32>
    %28 = arith.mulf %27, %1 : vector<8x128xf32>
    %c0_16 = arith.constant 0 : index
    %c0_17 = arith.constant 0 : index
    %c0_18 = arith.constant 0 : index
    %29 = vector.load %arg4[%c0_16, %c0_17, %c0_18] : memref<1x8x128xf32, #tpu.memory_space<vmem>>, vector<1x8x128xf32>
    %30 = vector.shape_cast %29 : vector<1x8x128xf32> to vector<8x128xf32>
    %31 = vector.shape_cast %28 : vector<8x128xf32> to vector<1x8x128xf32>
    tpu.vector_store %arg4[%c0_16, %c0_17, %c0_18], %31 {strides = array<i32>} : memref<1x8x128xf32, #tpu.memory_space<vmem>>, vector<1x8x128xf32>,
    return
  }
  func.func @transform_0(%arg0: i32) -> (i32, i32, i32) {
    %c0_i32 = arith.constant 0 : i32
    %c0_i32_0 = arith.constant 0 : i32
    %c0_i32_1 = arith.constant 0 : i32
    return %c0_i32, %arg0, %c0_i32_0 : i32, i32, i32
  }
  func.func @transform_1(%arg0: i32) -> (i32, i32) {
    %c0_i32 = arith.constant 0 : i32
    %c0_i32_0 = arith.constant 0 : i32
    return %arg0, %c0_i32 : i32, i32
  }
  func.func @transform_2(%arg0: i32) -> (i32, i32) {
    %c0_i32 = arith.constant 0 : i32
    %c0_i32_0 = arith.constant 0 : i32
    return %arg0, %c0_i32 : i32, i32
  }
  func.func @transform_3(%arg0: i32) -> (i32, i32, i32) {
    %c0_i32 = arith.constant 0 : i32
    %c0_i32_0 = arith.constant 0 : i32
    %c0_i32_1 = arith.constant 0 : i32
    return %arg0, %c0_i32, %c0_i32_0 : i32, i32, i32
  }
}

</mosaic_0001>

<llo_original>
// kernel: tpu_custom_call.1
$region0: #{tpu_custom_call.1}
  #allocation0 [shape = 'u32[]', space=smem, size = 0x4, offset = 0x4, fixed_abs, tag = 'smem constant byte address 0x4 - core index']
  #allocation1 [shape = 'u32[144,128]{1,0:T(1,128)}', space=vmem, size = 0x12000, scoped, tag = 'internal scratch']
  %s0 = inlined_call_operand.hbm [shape: f32[2,8,128], index: 0, kind: input, shape index: {}]
  %s1 = inlined_call_operand.hbm [shape: s32[8,128], index: 1, kind: input, shape index: {}]
  %s2 = inlined_call_operand.hbm [shape: f32[8,128], index: 2, kind: input, shape index: {}]
  %s3 = inlined_call_operand.hbm [shape: f32[1,8,128], index: 3, kind: output, shape index: {}]
  %s4 = sld [smem:[#allocation0]]
  $region34: #{tpu_custom_call.1} parent=0
    _
  %s6 = ssub.s32 1, %s4
  %s7 = scalar_select 0, %s6, %s4
  $region1: #{tpu_custom_call.1} parent=0
    #allocation2 [shape = 'u8[8192]{0}', space=vmem, size = 0x2000, scoped, tag = 'input window, operand 0, single buffered']
    #allocation3 [shape = 's32[1]{0}', space=sflag, size = 0x4, scoped, tag = 'scoped memory for tpu_custom_call.1']
    #allocation4 [shape = 's32[1]{0}', space=sflag, size = 0x4, scoped, tag = 'scoped memory for tpu_custom_call.1']
    #allocation5 [shape = 'u8[4096]{0}', space=vmem, size = 0x1000, scoped, tag = 'input window, operand 1, single buffered']
    #allocation6 [shape = 's32[1]{0}', space=sflag, size = 0x4, scoped, tag = 'scoped memory for tpu_custom_call.1']
    #allocation7 [shape = 'u8[4096]{0}', space=vmem, size = 0x1000, scoped, tag = 'input window, operand 2, single buffered']
    #allocation8 [shape = 'u8[4096]{0}', space=vmem, size = 0x1000, scoped, tag = 'output window, operand 0, single buffered']
    %8 = vsyncpa [#allocation3], 0
    %9 = vsyncpa [#allocation6], 0
    %10 = vsyncpa [#allocation4], 0
    // Predicated region
    $region2: #{tpu_custom_call.1} parent=1 // pred_check
      _
    $region3: #{tpu_custom_call.1} parent=1 // pred_check_branch
      %12 = sbr.rel (0) target = $region5
    $region4: #{tpu_custom_call.1} parent=1 // pred_region
      %s14 = ssub.s32 256, 256
      %15 = vsyncadd [#allocation3], %s14
      %s16 = sshll.u32 [#allocation2], 4
      %s17 = int_to_ptr.vmem [resolvable:$true] %s16
      %22 = dma.hbm_to_vmem [thread:$0]  %s0, 256, %s17, [#allocation3], 128, 128, 8
    $region5: #{tpu_custom_call.1} parent=1 // pred_fallthru
      _
    // Predicated region
    $region6: #{tpu_custom_call.1} parent=1 // pred_check
      _
    $region7: #{tpu_custom_call.1} parent=1 // pred_check_branch
      %24 = sbr.rel (0) target = $region9
    $region8: #{tpu_custom_call.1} parent=1 // pred_region
      %s26 = ssub.s32 128, 128
      %27 = vsyncadd [#allocation6], %s26
      %s29 = sshll.u32 [#allocation5], 4
      %s30 = int_to_ptr.vmem [resolvable:$true] %s29
      %32 = dma.hbm_to_vmem [thread:$0]  %s1, 128, %s30, [#allocation6]
    $region9: #{tpu_custom_call.1} parent=1 // pred_fallthru
      _
    // Predicated region
    $region10: #{tpu_custom_call.1} parent=1 // pred_check
      _
    $region11: #{tpu_custom_call.1} parent=1 // pred_check_branch
      %34 = sbr.rel (0) target = $region13
    $region12: #{tpu_custom_call.1} parent=1 // pred_region
      %s36 = ssub.s32 128, 128
      %37 = vsyncadd [#allocation6], %s36
      %s39 = sshll.u32 [#allocation7], 4
      %s40 = int_to_ptr.vmem [resolvable:$true] %s39
      %42 = dma.hbm_to_vmem [thread:$0]  %s2, 128, %s40, [#allocation6]
    $region13: #{tpu_custom_call.1} parent=1 // pred_fallthru
      _
    // Predicated region
    $region14: #{tpu_custom_call.1} parent=1 // pred_check
      _
    $region15: #{tpu_custom_call.1} parent=1 // pred_check_branch
      %44 = sbr.rel (0) target = $region17
    $region16: #{tpu_custom_call.1} parent=1 // pred_region
      %45 = dma.done [#allocation3], 256
    $region17: #{tpu_custom_call.1} parent=1 // pred_fallthru
      _
    // Predicated region
    $region18: #{tpu_custom_call.1} parent=1 // pred_check
      _
    $region19: #{tpu_custom_call.1} parent=1 // pred_check_branch
      %47 = sbr.rel (0) target = $region21
    $region20: #{tpu_custom_call.1} parent=1 // pred_region
      %48 = dma.done [#allocation6], 128
    $region21: #{tpu_custom_call.1} parent=1 // pred_fallthru
      _
    // Predicated region
    $region22: #{tpu_custom_call.1} parent=1 // pred_check
      _
    $region23: #{tpu_custom_call.1} parent=1 // pred_check_branch
      %50 = sbr.rel (0) target = $region25
    $region24: #{tpu_custom_call.1} parent=1 // pred_region
      %51 = dma.done [#allocation6], 128
    $region25: #{tpu_custom_call.1} parent=1 // pred_fallthru
      _
    %v52 = vld [vmem:[#allocation5] sm:$0xff]
    %v53 = vld [vmem:[#allocation7] sm:$0xff]
    %v54 = vld [vmem:[#allocation2] sm:$0xff]
    %vm55 = vcmp.eq.s32.totalorder %v52, 0
    %v56 = vsel %vm55, %v54, 0.0
    %s57 = scalar_lea.vmem [#allocation2], 8
    %v58 = vld [vmem:[%s57] sm:$0xff]
    %v59 = vmax.f32 %v54, %v58
    %vm60 = vcmp.eq.s32.totalorder %v52, 1
    %v61 = vsel %vm60, %v58, 0.0
    %v62 = vadd.f32 %v56, %v61
    %v63 = vmin.f32 %v54, %v58
    %v64 = vsub.f32 %v63, %v59
    %v65 = vmul.f32 %v64, 1.442695
    %v66 = vpow.pop %v65
    %v67 = vadd.f32 %v66, 1.0
    %v68 = vlog2.pop %v67
    %v69 = vmul.f32 %v68, 0.6931472
    %v70 = vadd.f32 %v59, %v69
    %v71 = vsub.f32 %v70, %v62
    %v72 = vmul.f32 %v71, %v53
    %73 = vst [vmem:[#allocation8] sm:$0xff] %v72
    // Predicated region
    $region26: #{tpu_custom_call.1} parent=1 // pred_check
      _
    $region27: #{tpu_custom_call.1} parent=1 // pred_check_branch
      %75 = sbr.rel (0) target = $region29
    $region28: #{tpu_custom_call.1} parent=1 // pred_region
      %s77 = ssub.s32 128, 128
      %78 = vsyncadd [#allocation4], %s77
      %s80 = sshll.u32 [#allocation8], 4
      %s81 = int_to_ptr.vmem [resolvable:$true] %s80
      %83 = dma.vmem_to_hbm [thread:$0]  %s81, 128, %s3, [#allocation4]
    $region29: #{tpu_custom_call.1} parent=1 // pred_fallthru
      _
    // Predicated region
    $region30: #{tpu_custom_call.1} parent=1 // pred_check
      _
    $region31: #{tpu_custom_call.1} parent=1 // pred_check_branch
      %85 = sbr.rel (0) target = $region33
    $region32: #{tpu_custom_call.1} parent=1 // pred_region
      %86 = dma.done [#allocation4], 128
    $region33: #{tpu_custom_call.1} parent=1 // pred_fallthru
      _
    %87 = vsyncpa [#allocation3], 1
    %88 = vsyncpa [#allocation6], 1
    %89 = vsyncpa [#allocation4], 1

</llo_original>
